<compile_context>
chip_gen: v7x
topology: tpu7x:2x2x1
jax: 0.10.0
libtpu: 0.0.40
codegen_flags: <defaults>
</compile_context>

<pallas_src>
import functools

import jax
import jax.numpy as jnp
from jax.experimental import pallas as pl
from jax.experimental.pallas import tpu as pltpu


def _row_stats_kernel(out_ref, tgt_ref, nll_ref, kl_ref, *, inv_c):
    """Per-row-tile kernel: fused log-softmax reductions.

    out_ref, tgt_ref : (TR, C) in VMEM (native dtype; cast to f32 here)
    nll_ref, kl_ref  : (TR, 1) f32 in VMEM
    """
    x = out_ref[...].astype(jnp.float32)
    t = tgt_ref[...].astype(jnp.float32)

    # Numerically-stable log-sum-exp over the class (lane) axis.
    m = jnp.max(x, axis=-1, keepdims=True)
    lse = jnp.log(jnp.sum(jnp.exp(x - m), axis=-1, keepdims=True)) + m   # (TR, 1)

    # Fused reductions (no (TR, C) logp temporary):
    #   nll = sum(-(x - lse) * t) = sum(t)*lse - sum(x*t)
    #   kl  = -mean(x - lse)      = lse - sum(x)/C
    sx = jnp.sum(x, axis=-1, keepdims=True)                              # (TR, 1)
    sxt = jnp.sum(x * t, axis=-1, keepdims=True)                         # (TR, 1)
    st = jnp.sum(t, axis=-1, keepdims=True)                              # (TR, 1)

    nll_ref[...] = (st * lse - sxt).astype(nll_ref.dtype)
    kl_ref[...] = (lse - sx * inv_c).astype(kl_ref.dtype)


def _choose_row_tile(n_rows, n_classes, itemsize):
    """Pick a row-tile that keeps 2 inputs x 2 pipeline buffers well under the
    default scoped VMEM limit on every generation (incl. v7x's 64 MiB)."""
    budget = 16 * 1024 * 1024                      # bytes for double-buffered inputs
    bytes_per_row = 2 * 2 * n_classes * itemsize   # 2 inputs x 2 buffers
    tr = budget // max(bytes_per_row, 1)
    tr = max(8, min(tr, 1024))                     # cap; amortizes grid-step overhead
    tr = (tr // 8) * 8                             # sublane alignment (8)
    rows_pad8 = ((n_rows + 7) // 8) * 8
    return max(8, min(tr, rows_pad8))              # don't over-pad tiny inputs


def label_smoothing_loss(output, target, alpha, *, row_tile=None):
    """JAX/Pallas equivalent of LabelSmoothingLoss(alpha).forward (training)."""
    if alpha < 0.0 or alpha > 1.0:
        raise ValueError("alpha should be a value between 0 and 1")
    assert output.shape == target.shape
    B, one, S, C = output.shape
    R = B * one * S

    # Flatten to a row-major (R, C) slab; keep native dtype (no wrapper upcast).
    x2 = output.reshape(R, C)
    t2 = target.reshape(R, C)

    tr = row_tile if row_tile is not None else _choose_row_tile(R, C, x2.dtype.itemsize)

    # Pad rows to a multiple of the tile.  Zero rows are harmless: t=0 gives
    # nll=0 and the padded kl rows are sliced off below.
    Rp = ((R + tr - 1) // tr) * tr
    if Rp != R:
        pad = Rp - R
        x2 = jnp.pad(x2, ((0, pad), (0, 0)))
        t2 = jnp.pad(t2, ((0, pad), (0, 0)))

    kernel = functools.partial(_row_stats_kernel, inv_c=1.0 / float(C))

    nll, kl = pl.pallas_call(
        kernel,
        out_shape=(
            jax.ShapeDtypeStruct((Rp, 1), jnp.float32),
            jax.ShapeDtypeStruct((Rp, 1), jnp.float32),
        ),
        grid=(Rp // tr,),
        in_specs=[
            pl.BlockSpec((tr, C), lambda i: (i, 0)),
            pl.BlockSpec((tr, C), lambda i: (i, 0)),
        ],
        out_specs=(
            pl.BlockSpec((tr, 1), lambda i: (i, 0)),
            pl.BlockSpec((tr, 1), lambda i: (i, 0)),
        ),
        compiler_params=pltpu.CompilerParams(
            dimension_semantics=("parallel",),
        ),
    )(x2, t2)

    nll = nll[:R, 0]
    kl = kl[:R, 0]

    # Global l1 sum + final blend in the wrapper (O(R), keeps tiles independent).
    l1_loss = jnp.sum(nll)
    res = l1_loss * (1.0 - alpha) + alpha * kl
    return res.reshape(B, one, S)


def _reference(output, target, alpha):
    logp = jax.nn.log_softmax(output, axis=-1)
    nll = (-logp * target).sum(-1)
    l1_loss = nll.squeeze(1).sum()
    kl_div = -logp.mean(-1)
    return l1_loss * (1.0 - alpha) + alpha * kl_div


if __name__ == "__main__":
    key = jax.random.PRNGKey(0)
    k1, k2 = jax.random.split(key)

    B, S, C = 2, 8, 32
    alpha = 0.1  # module "parameter" (no learnable weights in __init__)

    output = jax.random.normal(k1, (B, 1, S, C), dtype=jnp.float32)
    # Soft-label targets (same shape as output, rows sum to 1).
    target = jax.nn.softmax(jax.random.normal(k2, (B, 1, S, C), dtype=jnp.float32), axis=-1)

    result = label_smoothing_loss(output, target, alpha)
    jax.block_until_ready(result)

    ref = _reference(output, target, alpha)
    assert result.shape == ref.shape == (B, 1, S)
    assert jnp.allclose(result, ref, atol=1e-4, rtol=1e-4)

    print("KERNEL_OK")
</pallas_src>

<mosaic_0001>
module attributes {stable_mosaic.version = 11 : i64} {
  func.func @_row_stats_kernel(%arg0: i32, %arg1: memref<16x32xf32, #tpu.memory_space<vmem>>, %arg2: memref<16x32xf32, #tpu.memory_space<vmem>>, %arg3: memref<16x1xf32, #tpu.memory_space<vmem>>, %arg4: memref<16x1xf32, #tpu.memory_space<vmem>>) attributes {dimension_semantics = [#tpu.dimension_semantics<parallel>], iteration_bounds = array<i64: 1>, scalar_prefetch = 0 : i64, scratch_operands = 0 : i64, tpu.core_type = #tpu.core_type<tc>, window_params = [{transform_indices = @transform_0, window_bounds = array<i64: 16, 32>}, {transform_indices = @transform_1, window_bounds = array<i64: 16, 32>}, {transform_indices = @transform_2, window_bounds = array<i64: 16, 1>}, {transform_indices = @transform_3, window_bounds = array<i64: 16, 1>}]} {
    %c0 = arith.constant 0 : index
    %c0_0 = arith.constant 0 : index
    %0 = vector.load %arg1[%c0, %c0_0] : memref<16x32xf32, #tpu.memory_space<vmem>>, vector<16x32xf32>
    %c0_1 = arith.constant 0 : index
    %c0_2 = arith.constant 0 : index
    %1 = vector.load %arg2[%c0_1, %c0_2] : memref<16x32xf32, #tpu.memory_space<vmem>>, vector<16x32xf32>
    %cst = arith.constant dense<0xFF800000> : vector<16xf32>
    %2 = vector.multi_reduction <maximumf>, %0, %cst [1] : vector<16x32xf32> to vector<16xf32>
    %3 = vector.shape_cast %2 : vector<16xf32> to vector<16x1xf32>
    %4 = vector.broadcast %3 : vector<16x1xf32> to vector<16x32xf32>
    %5 = arith.subf %0, %4 : vector<16x32xf32>
    %6 = math.exp %5 : vector<16x32xf32>
    %cst_3 = arith.constant dense<0.000000e+00> : vector<16xf32>
    %7 = vector.multi_reduction <add>, %6, %cst_3 [1] : vector<16x32xf32> to vector<16xf32>
    %8 = vector.shape_cast %7 : vector<16xf32> to vector<16x1xf32>
    %9 = math.log %8 : vector<16x1xf32>
    %10 = arith.addf %9, %3 : vector<16x1xf32>
    %cst_4 = arith.constant dense<0.000000e+00> : vector<16xf32>
    %11 = vector.multi_reduction <add>, %0, %cst_4 [1] : vector<16x32xf32> to vector<16xf32>
    %12 = vector.shape_cast %11 : vector<16xf32> to vector<16x1xf32>
    %13 = arith.mulf %0, %1 : vector<16x32xf32>
    %cst_5 = arith.constant dense<0.000000e+00> : vector<16xf32>
    %14 = vector.multi_reduction <add>, %13, %cst_5 [1] : vector<16x32xf32> to vector<16xf32>
    %15 = vector.shape_cast %14 : vector<16xf32> to vector<16x1xf32>
    %cst_6 = arith.constant dense<0.000000e+00> : vector<16xf32>
    %16 = vector.multi_reduction <add>, %1, %cst_6 [1] : vector<16x32xf32> to vector<16xf32>
    %17 = vector.shape_cast %16 : vector<16xf32> to vector<16x1xf32>
    %18 = arith.mulf %17, %10 : vector<16x1xf32>
    %19 = arith.subf %18, %15 : vector<16x1xf32>
    %c0_7 = arith.constant 0 : index
    %c0_8 = arith.constant 0 : index
    %20 = vector.load %arg3[%c0_7, %c0_8] : memref<16x1xf32, #tpu.memory_space<vmem>>, vector<16x1xf32>
    tpu.vector_store %arg3[%c0_7, %c0_8], %19 {strides = array<i32>} : memref<16x1xf32, #tpu.memory_space<vmem>>, vector<16x1xf32>,
    %cst_9 = arith.constant 3.125000e-02 : f32
    %21 = vector.broadcast %cst_9 : f32 to vector<16x1xf32>
    %22 = arith.mulf %12, %21 : vector<16x1xf32>
    %23 = arith.subf %10, %22 : vector<16x1xf32>
    %c0_10 = arith.constant 0 : index
    %c0_11 = arith.constant 0 : index
    %24 = vector.load %arg4[%c0_10, %c0_11] : memref<16x1xf32, #tpu.memory_space<vmem>>, vector<16x1xf32>
    tpu.vector_store %arg4[%c0_10, %c0_11], %23 {strides = array<i32>} : memref<16x1xf32, #tpu.memory_space<vmem>>, vector<16x1xf32>,
    return
  }
  func.func @transform_0(%arg0: i32) -> (i32, i32) {
    %c0_i32 = arith.constant 0 : i32
    %c0_i32_0 = arith.constant 0 : i32
    return %arg0, %c0_i32 : i32, i32
  }
  func.func @transform_1(%arg0: i32) -> (i32, i32) {
    %c0_i32 = arith.constant 0 : i32
    %c0_i32_0 = arith.constant 0 : i32
    return %arg0, %c0_i32 : i32, i32
  }
  func.func @transform_2(%arg0: i32) -> (i32, i32) {
    %c0_i32 = arith.constant 0 : i32
    %c0_i32_0 = arith.constant 0 : i32
    return %arg0, %c0_i32 : i32, i32
  }
  func.func @transform_3(%arg0: i32) -> (i32, i32) {
    %c0_i32 = arith.constant 0 : i32
    %c0_i32_0 = arith.constant 0 : i32
    return %arg0, %c0_i32 : i32, i32
  }
}

</mosaic_0001>

<llo_original>
// kernel: tpu_custom_call.1
$region0: #{tpu_custom_call.1}
  #allocation0 [shape = 'u32[]', space=smem, size = 0x4, offset = 0x4, fixed_abs, tag = 'smem constant byte address 0x4 - core index']
  #allocation1 [shape = 'u32[144,128]{1,0:T(1,128)}', space=vmem, size = 0x12000, scoped, tag = 'internal scratch']
  %s0 = inlined_call_operand.hbm [shape: f32[16,32], index: 0, kind: input, shape index: {}]
  %s1 = inlined_call_operand.hbm [shape: f32[16,32], index: 1, kind: input, shape index: {}]
  %s2 = inlined_call_operand.vmem [shape: f32[16,1], index: 2, kind: output, shape index: {0}]
  %s3 = inlined_call_operand.vmem [shape: f32[16,1], index: 3, kind: output, shape index: {1}]
  %4 = xla_tuple %s2, %s3
  %s5 = sld [smem:[#allocation0]]
  $region34: #{tpu_custom_call.1} parent=0
    _
  %s7 = ssub.s32 1, %s5
  %s8 = scalar_select 0, %s7, %s5
  $region1: #{tpu_custom_call.1} parent=0
    #allocation2 [shape = 'u8[8192]{0}', space=vmem, size = 0x2000, scoped, tag = 'input window, operand 0, single buffered']
    #allocation3 [shape = 's32[1]{0}', space=sflag, size = 0x4, scoped, tag = 'scoped memory for tpu_custom_call.1']
    #allocation4 [shape = 'u8[8192]{0}', space=vmem, size = 0x2000, scoped, tag = 'input window, operand 1, single buffered']
    #allocation5 [shape = 's32[1]{0}', space=sflag, size = 0x4, scoped, tag = 'scoped memory for tpu_custom_call.1']
    %9 = vsyncpa [#allocation3], 0
    %10 = vsyncpa [#allocation5], 0
    // Predicated region
    $region2: #{tpu_custom_call.1} parent=1 // pred_check
      _
    $region3: #{tpu_custom_call.1} parent=1 // pred_check_branch
      %12 = sbr.rel (0) target = $region5
    $region4: #{tpu_custom_call.1} parent=1 // pred_region
      %s14 = ssub.s32 256, 256
      %15 = vsyncadd [#allocation3], %s14
      %s16 = sshll.u32 [#allocation2], 4
      %s17 = int_to_ptr.vmem [resolvable:$true] %s16
      %22 = dma.hbm_to_vmem [thread:$0]  %s0, 256, %s17, [#allocation3], 128, 128, 8
    $region5: #{tpu_custom_call.1} parent=1 // pred_fallthru
      _
    // Predicated region
    $region6: #{tpu_custom_call.1} parent=1 // pred_check
      _
    $region7: #{tpu_custom_call.1} parent=1 // pred_check_branch
      %24 = sbr.rel (0) target = $region9
    $region8: #{tpu_custom_call.1} parent=1 // pred_region
      %s26 = ssub.s32 256, 256
      %27 = vsyncadd [#allocation5], %s26
      %s28 = sshll.u32 [#allocation4], 4
      %s29 = int_to_ptr.vmem [resolvable:$true] %s28
      %34 = dma.hbm_to_vmem [thread:$0]  %s1, 256, %s29, [#allocation5], 128, 128, 8
    $region9: #{tpu_custom_call.1} parent=1 // pred_fallthru
      _
    // Predicated region
    $region10: #{tpu_custom_call.1} parent=1 // pred_check
      _
    $region11: #{tpu_custom_call.1} parent=1 // pred_check_branch
      %36 = sbr.rel (0) target = $region13
    $region12: #{tpu_custom_call.1} parent=1 // pred_region
      %37 = dma.done [#allocation3], 256
    $region13: #{tpu_custom_call.1} parent=1 // pred_fallthru
      _
    // Predicated region
    $region14: #{tpu_custom_call.1} parent=1 // pred_check
      _
    $region15: #{tpu_custom_call.1} parent=1 // pred_check_branch
      %39 = sbr.rel (0) target = $region17
    $region16: #{tpu_custom_call.1} parent=1 // pred_region
      %40 = dma.done [#allocation5], 256
    $region17: #{tpu_custom_call.1} parent=1 // pred_fallthru
      _
    %v41 = vld [vmem:[#allocation2] sm:$0xff]
    %v42 = vld [vmem:[#allocation2 + $0x8] sm:$0xff]
    %v43 = vld [vmem:[#allocation4] sm:$0xff]
    %v44 = vld [vmem:[#allocation4 + $0x8] sm:$0xff]
    %vm45 = vcmask 261120
    %v46 = vsel %vm45, %v41, -inf
    %47 = vmax.xlane.f32.xlu0 %v46
    %v48 = vpop.xlane.xlu0 %47
    %v49 = vsel %vm45, %v42, -inf
    %50 = vmax.xlane.f32.xlu0 %v49
    %v51 = vpop.xlane.xlu0 %50
    %v52 = vsub.f32 %v41, %v48
    %v53 = vsub.f32 %v42, %v51
    %v54 = vmul.f32 %v52, 1.442695
    %v55 = vpow.pop %v54
    %v56 = vmul.f32 %v53, 1.442695
    %v57 = vpow.pop %v56
    %v58 = vsel %vm45, %v55, 0.0
    %59 = vadd.xlane.f32.xlu0 %v58
    %v60 = vpop.xlane.xlu0 %59
    %v61 = vsel %vm45, %v57, 0.0
    %62 = vadd.xlane.f32.xlu0 %v61
    %v63 = vpop.xlane.xlu0 %62
    %v64 = vlog2.pop %v60
    %v65 = vmul.f32 %v64, 0.6931472
    %v66 = vlog2.pop %v63
    %v67 = vmul.f32 %v66, 0.6931472
    %v68 = vadd.f32 %v65, %v48
    %v69 = vadd.f32 %v67, %v51
    %v70 = vsel %vm45, %v41, 0.0
    %71 = vadd.xlane.f32.xlu0 %v70
    %v72 = vpop.xlane.xlu0 %71
    %v73 = vsel %vm45, %v42, 0.0
    %74 = vadd.xlane.f32.xlu0 %v73
    %v75 = vpop.xlane.xlu0 %74
    %v76 = vmul.f32 %v41, %v43
    %v77 = vmul.f32 %v42, %v44
    %v78 = vsel %vm45, %v76, 0.0
    %79 = vadd.xlane.f32.xlu0 %v78
    %v80 = vpop.xlane.xlu0 %79
    %v81 = vsel %vm45, %v77, 0.0
    %82 = vadd.xlane.f32.xlu0 %v81
    %v83 = vpop.xlane.xlu0 %82
    %v84 = vsel %vm45, %v43, 0.0
    %85 = vadd.xlane.f32.xlu0 %v84
    %v86 = vpop.xlane.xlu0 %85
    %v87 = vsel %vm45, %v44, 0.0
    %88 = vadd.xlane.f32.xlu0 %v87
    %v89 = vpop.xlane.xlu0 %88
    %v90 = vmul.f32 %v86, %v68
    %v91 = vmul.f32 %v89, %v69
    %v92 = vsub.f32 %v90, %v80
    %v93 = vsub.f32 %v91, %v83
    %vm94 = vcmask 7168
    %95 = vst.msk [vmem:[%s2] sm:$0xff] %vm94, %v92
    %96 = vst.msk [vmem:[%s2 + $0x8] sm:$0xff] %vm94, %v93
    %v97 = vmul.f32 %v72, 0.03125
    %v98 = vmul.f32 %v75, 0.03125
    %v99 = vsub.f32 %v68, %v97
    %v100 = vsub.f32 %v69, %v98
    %101 = vst.msk [vmem:[%s3] sm:$0xff] %vm94, %v99
    %102 = vst.msk [vmem:[%s3 + $0x8] sm:$0xff] %vm94, %v100
    // Predicated region
    $region18: #{tpu_custom_call.1} parent=1 // pred_check
      _
    $region19: #{tpu_custom_call.1} parent=1 // pred_check_branch
      %104 = sbr.rel (0) target = $region21
    $region20: #{tpu_custom_call.1} parent=1 // pred_region
      _
    $region21: #{tpu_custom_call.1} parent=1 // pred_fallthru
      _
    // Predicated region
    $region22: #{tpu_custom_call.1} parent=1 // pred_check
      _
    $region23: #{tpu_custom_call.1} parent=1 // pred_check_branch
      %106 = sbr.rel (0) target = $region25
    $region24: #{tpu_custom_call.1} parent=1 // pred_region
      _
    $region25: #{tpu_custom_call.1} parent=1 // pred_fallthru
      _
    // Predicated region
    $region26: #{tpu_custom_call.1} parent=1 // pred_check
      _
    $region27: #{tpu_custom_call.1} parent=1 // pred_check_branch
      %108 = sbr.rel (0) target = $region29
    $region28: #{tpu_custom_call.1} parent=1 // pred_region
      _
    $region29: #{tpu_custom_call.1} parent=1 // pred_fallthru
      _
    // Predicated region
    $region30: #{tpu_custom_call.1} parent=1 // pred_check
      _
    $region31: #{tpu_custom_call.1} parent=1 // pred_check_branch
      %110 = sbr.rel (0) target = $region33
    $region32: #{tpu_custom_call.1} parent=1 // pred_region
      _
    $region33: #{tpu_custom_call.1} parent=1 // pred_fallthru
      _
    %111 = vsyncpa [#allocation3], 1
    %112 = vsyncpa [#allocation5], 1

</llo_original>
